<compile_context>
chip_gen: v5e
topology: v5e:2x2
jax: 0.10.0
libtpu: 0.0.40
codegen_flags: <defaults>
</compile_context>

<pallas_src>
import jax
import jax.numpy as jnp
from jax.experimental import pallas as pl
from jax.experimental.pallas import tpu as pltpu


# ----------------------------------------------------------------------------
# helpers
# ----------------------------------------------------------------------------
def _llama_hidden_dim(hidden_dim: int, multiple_of: int, ffn_dim_multiplier):
    hidden_dim = int(2 * hidden_dim / 3)
    if ffn_dim_multiplier is not None:
        hidden_dim = int(ffn_dim_multiplier * hidden_dim)
    hidden_dim = multiple_of * ((hidden_dim + multiple_of - 1) // multiple_of)
    return hidden_dim


def _round_up(x: int, m: int) -> int:
    return ((x + m - 1) // m) * m


def _vmem_capacity_bytes() -> int:
    try:
        return int(pltpu.get_tpu_info().vmem_capacity_bytes)
    except Exception:
        return 128 * 1024 * 1024  # v5e/v6e default; conservative fallback


def _vmem_estimate(tm: int, th: int, dim: int, out_bytes: int,
                   use_scratch: bool) -> int:
    """Rough double-buffered VMEM footprint of the kernel (bytes)."""
    b = 2 * tm * dim * 2              # x tile, bf16, double-buffered
    b += 2 * 2 * dim * th * 2         # w1t + w3t tiles
    b += 2 * th * dim * 2             # w2t tile
    b += 2 * tm * dim * out_bytes     # output tile
    if use_scratch:
        b += tm * dim * 4             # f32 accumulator scratch
    return b


# ----------------------------------------------------------------------------
# kernels
# ----------------------------------------------------------------------------
def _ffn_kernel_accum_out(x_ref, w1_ref, w3_ref, w2_ref, o_ref):
    """f32 output: accumulate directly into the resident output block."""
    h = pl.program_id(1)
    xb = x_ref[...]                                                    # (tm, dim) bf16
    a = jnp.dot(xb, w1_ref[...], preferred_element_type=jnp.float32)  # (tm, th) f32
    b = jnp.dot(xb, w3_ref[...], preferred_element_type=jnp.float32)  # (tm, th) f32
    g = (a * jax.nn.sigmoid(a)) * b                                    # SiLU in f32
    contrib = jnp.dot(g.astype(w2_ref.dtype), w2_ref[...],
                      preferred_element_type=jnp.float32)              # (tm, dim) f32

    @pl.when(h == 0)
    def _():
        o_ref[...] = contrib

    @pl.when(h > 0)
    def _():
        o_ref[...] += contrib


def _ffn_kernel_scratch(x_ref, w1_ref, w3_ref, w2_ref, o_ref, acc_ref):
    """Non-f32 output: accumulate in an f32 scratch, cast once at the end."""
    h = pl.program_id(1)

    @pl.when(h == 0)
    def _():
        acc_ref[...] = jnp.zeros_like(acc_ref)

    xb = x_ref[...]
    a = jnp.dot(xb, w1_ref[...], preferred_element_type=jnp.float32)
    b = jnp.dot(xb, w3_ref[...], preferred_element_type=jnp.float32)
    g = (a * jax.nn.sigmoid(a)) * b
    acc_ref[...] += jnp.dot(g.astype(w2_ref.dtype), w2_ref[...],
                            preferred_element_type=jnp.float32)

    @pl.when(h == pl.num_programs(1) - 1)
    def _():
        o_ref[...] = acc_ref[...].astype(o_ref.dtype)


# ----------------------------------------------------------------------------
# wrapper
# ----------------------------------------------------------------------------
def feed_forward(x, w1t, w3t, w2t, *, tm=None, th=None, out_dtype=None):
    """x: [T, dim]; w1t/w3t: [dim, hidden] (bf16); w2t: [hidden, dim] (bf16)."""
    T, dim = x.shape
    hidden = w1t.shape[1]
    assert w3t.shape == (dim, hidden) and w2t.shape == (hidden, dim)
    assert hidden % 128 == 0, "pad hidden to a 128 multiple before the kernel"
    out_dtype = jnp.dtype(out_dtype or x.dtype)
    compute_dtype = w1t.dtype
    use_scratch = out_dtype != jnp.float32

    # --- hidden tile: 256 fills the 2x256^2 MXU; 512 only wastes VMEM. ------
    if th is None:
        th = 256 if hidden % 256 == 0 else 128

    # --- token tile --------------------------------------------------------
    if tm is None:
        if T <= 128:
            # decode / tiny shapes: single well-packed tile (bf16 sublane = 16)
            tm = max(16, _round_up(T, 16))
        else:
            tm = 512
            # keep >= 2 token tiles when possible (v7x has 2 TensorCores)
            while tm > 128 and -(-T // tm) < 2:
                tm //= 2

    # --- generation-aware VMEM budget (v7x has only 64 MiB per TC) ----------
    vmem_cap = _vmem_capacity_bytes()
    budget = int(0.70 * vmem_cap)
    out_bytes = out_dtype.itemsize
    while _vmem_estimate(tm, th, dim, out_bytes, use_scratch) > budget and th > 128:
        th //= 2
    while _vmem_estimate(tm, th, dim, out_bytes, use_scratch) > budget and tm > 128:
        tm //= 2
    assert hidden % th == 0

    # --- pad tokens to a tile multiple (zero rows -> zero output rows) ------
    T_pad = _round_up(T, tm)
    xc = x.astype(compute_dtype)
    if T_pad != T:
        xc = jnp.pad(xc, ((0, T_pad - T), (0, 0)))

    grid = (T_pad // tm, hidden // th)

    if use_scratch:
        kernel = _ffn_kernel_scratch
        scratch_shapes = [pltpu.VMEM((tm, dim), jnp.float32)]
    else:
        kernel = _ffn_kernel_accum_out
        scratch_shapes = []          # resident output block is the accumulator

    wbytes = jnp.dtype(compute_dtype).itemsize
    cost = pl.CostEstimate(
        flops=6 * T_pad * dim * hidden,        # three (T, dim)x(dim, hidden)-class matmuls
        transcendentals=T_pad * hidden,        # sigmoid in SiLU
        bytes_accessed=(T_pad * dim * wbytes                       # x
                        + 3 * dim * hidden * wbytes * grid[0]       # weights re-streamed per token tile
                        + T_pad * dim * out_bytes),                 # output
    )

    out = pl.pallas_call(
        kernel,
        out_shape=jax.ShapeDtypeStruct((T_pad, dim), out_dtype),
        grid_spec=pltpu.PrefetchScalarGridSpec(
            num_scalar_prefetch=0,
            grid=grid,
            in_specs=[
                pl.BlockSpec((tm, dim), lambda i, h: (i, 0)),    # x tile (const over h)
                pl.BlockSpec((dim, th), lambda i, h: (0, h)),    # w1t tile
                pl.BlockSpec((dim, th), lambda i, h: (0, h)),    # w3t tile
                pl.BlockSpec((th, dim), lambda i, h: (h, 0)),    # w2t tile
            ],
            out_specs=pl.BlockSpec((tm, dim), lambda i, h: (i, 0)),
            scratch_shapes=scratch_shapes,
        ),
        compiler_params=pltpu.CompilerParams(
            dimension_semantics=("parallel", "arbitrary"),
            vmem_limit_bytes=budget,
        ),
        cost_estimate=cost,
    )(xc, w1t, w3t, w2t)

    if T_pad != T:
        out = out[:T]
    return out


# ----------------------------------------------------------------------------
# module
# ----------------------------------------------------------------------------
class FeedForward:
    """JAX/Pallas port of llama3 FeedForward (SwiGLU, bias-free linears)."""

    def __init__(self, dim, hidden_dim, multiple_of, ffn_dim_multiplier, key,
                 compute_dtype=jnp.bfloat16):
        self.dim = dim
        self.hidden_dim = _llama_hidden_dim(hidden_dim, multiple_of,
                                            ffn_dim_multiplier)
        k1, k2, k3 = jax.random.split(key, 3)
        s_in = 1.0 / (dim ** 0.5)
        s_hid = 1.0 / (self.hidden_dim ** 0.5)
        w1t = jax.random.uniform(k1, (dim, self.hidden_dim),
                                 jnp.float32, -s_in, s_in)
        w3t = jax.random.uniform(k3, (dim, self.hidden_dim),
                                 jnp.float32, -s_in, s_in)
        w2t = jax.random.uniform(k2, (self.hidden_dim, dim),
                                 jnp.float32, -s_hid, s_hid)

        # Zero-pad hidden to a 128 multiple once (padded SiLU lanes contribute 0).
        hpad = _round_up(self.hidden_dim, 128) - self.hidden_dim
        if hpad:
            w1t = jnp.pad(w1t, ((0, 0), (0, hpad)))
            w3t = jnp.pad(w3t, ((0, 0), (0, hpad)))
            w2t = jnp.pad(w2t, ((0, hpad), (0, 0)))

        # Cast ONCE at init: no per-call f32->bf16 weight pass through HBM.
        self.w1t = w1t.astype(compute_dtype)
        self.w3t = w3t.astype(compute_dtype)
        self.w2t = w2t.astype(compute_dtype)

    def __call__(self, x):
        # x: [batch, seq, dim]
        B, S, D = x.shape
        xf = x.reshape(B * S, D)
        out = feed_forward(xf, self.w1t, self.w3t, self.w2t, out_dtype=x.dtype)
        return out.reshape(B, S, D)


# ----------------------------------------------------------------------------
# demo / self-test
# ----------------------------------------------------------------------------
if __name__ == "__main__":
    key = jax.random.PRNGKey(0)
    k_param, k_x = jax.random.split(key)

    batch, seq, dim = 2, 8, 128
    ffn = FeedForward(dim=dim, hidden_dim=512, multiple_of=128,
                      ffn_dim_multiplier=None, key=k_param)   # hidden -> 384

    x = jax.random.normal(k_x, (batch, seq, dim), jnp.float32)

    out = jax.block_until_ready(ffn(x))

    # Pure-JAX reference with matched bf16 operand quantization.
    xf = x.reshape(-1, dim).astype(jnp.bfloat16)
    a = jnp.dot(xf, ffn.w1t, preferred_element_type=jnp.float32)
    b = jnp.dot(xf, ffn.w3t, preferred_element_type=jnp.float32)
    g = (a * jax.nn.sigmoid(a)) * b
    ref = jnp.dot(g.astype(jnp.bfloat16), ffn.w2t,
                  preferred_element_type=jnp.float32).reshape(batch, seq, dim)

    assert out.shape == (batch, seq, dim)
    assert jnp.allclose(out, ref, atol=1e-2, rtol=1e-2), "mismatch vs reference"

    print("KERNEL_OK")
</pallas_src>

<mosaic_0001>
module attributes {stable_mosaic.version = 11 : i64} {
  func.func @_ffn_kernel_accum_out(%arg0: i32, %arg1: i32, %arg2: memref<16x128xbf16, #tpu.memory_space<vmem>>, %arg3: memref<128x128xbf16, #tpu.memory_space<vmem>>, %arg4: memref<128x128xbf16, #tpu.memory_space<vmem>>, %arg5: memref<128x128xbf16, #tpu.memory_space<vmem>>, %arg6: memref<16x128xf32, #tpu.memory_space<vmem>>) attributes {dimension_semantics = [#tpu.dimension_semantics<parallel>, #tpu.dimension_semantics<arbitrary>], iteration_bounds = array<i64: 1, 3>, scalar_prefetch = 0 : i64, scratch_operands = 0 : i64, tpu.core_type = #tpu.core_type<tc>, window_params = [{transform_indices = @transform_0, window_bounds = array<i64: 16, 128>}, {transform_indices = @transform_1, window_bounds = array<i64: 128, 128>}, {transform_indices = @transform_2, window_bounds = array<i64: 128, 128>}, {transform_indices = @transform_3, window_bounds = array<i64: 128, 128>}, {transform_indices = @transform_4, window_bounds = array<i64: 16, 128>}]} {
    %c0 = arith.constant 0 : index
    %c0_0 = arith.constant 0 : index
    %0 = vector.load %arg2[%c0, %c0_0] : memref<16x128xbf16, #tpu.memory_space<vmem>>, vector<16x128xbf16>
    %c0_1 = arith.constant 0 : index
    %c0_2 = arith.constant 0 : index
    %1 = vector.load %arg3[%c0_1, %c0_2] : memref<128x128xbf16, #tpu.memory_space<vmem>>, vector<128x128xbf16>
    %cst = arith.constant dense<0.000000e+00> : vector<16x128xf32>
    %2 = tpu.matmul %0, %1, %cst {dimension_numbers = #tpu.dot_dimension_numbers<[1], [0], [0], [1], [0, 0, 1, 1], [], []>} : vector<16x128xbf16>, vector<128x128xbf16>, vector<16x128xf32> -> vector<16x128xf32>
    %c0_3 = arith.constant 0 : index
    %c0_4 = arith.constant 0 : index
    %3 = vector.load %arg4[%c0_3, %c0_4] : memref<128x128xbf16, #tpu.memory_space<vmem>>, vector<128x128xbf16>
    %cst_5 = arith.constant dense<0.000000e+00> : vector<16x128xf32>
    %4 = tpu.matmul %0, %3, %cst_5 {dimension_numbers = #tpu.dot_dimension_numbers<[1], [0], [0], [1], [0, 0, 1, 1], [], []>} : vector<16x128xbf16>, vector<128x128xbf16>, vector<16x128xf32> -> vector<16x128xf32>
    %5 = arith.negf %2 : vector<16x128xf32>
    %6 = math.exp %5 : vector<16x128xf32>
    %cst_6 = arith.constant 1.000000e+00 : f32
    %7 = vector.broadcast %cst_6 : f32 to vector<16x128xf32>
    %8 = arith.addf %7, %6 : vector<16x128xf32>
    %9 = arith.divf %7, %8 : vector<16x128xf32>
    %10 = arith.mulf %2, %9 : vector<16x128xf32>
    %11 = arith.mulf %10, %4 : vector<16x128xf32>
    %12 = arith.truncf %11 : vector<16x128xf32> to vector<16x128xbf16>
    %c0_7 = arith.constant 0 : index
    %c0_8 = arith.constant 0 : index
    %13 = vector.load %arg5[%c0_7, %c0_8] : memref<128x128xbf16, #tpu.memory_space<vmem>>, vector<128x128xbf16>
    %cst_9 = arith.constant dense<0.000000e+00> : vector<16x128xf32>
    %14 = tpu.matmul %12, %13, %cst_9 {dimension_numbers = #tpu.dot_dimension_numbers<[1], [0], [0], [1], [0, 0, 1, 1], [], []>} : vector<16x128xbf16>, vector<128x128xbf16>, vector<16x128xf32> -> vector<16x128xf32>
    %c0_i32 = arith.constant 0 : i32
    %15 = arith.cmpi eq, %arg1, %c0_i32 : i32
    %16 = arith.extui %15 : i1 to i32
    %c0_i32_10 = arith.constant 0 : i32
    %17 = arith.cmpi ne, %16, %c0_i32_10 : i32
    scf.if %17 {
      %c0_13 = arith.constant 0 : index
      %c0_14 = arith.constant 0 : index
      %21 = vector.load %arg6[%c0_13, %c0_14] : memref<16x128xf32, #tpu.memory_space<vmem>>, vector<16x128xf32>
      tpu.vector_store %arg6[%c0_13, %c0_14], %14 {strides = array<i32>} : memref<16x128xf32, #tpu.memory_space<vmem>>, vector<16x128xf32>,
    } else {
    }
    %c0_i32_11 = arith.constant 0 : i32
    %18 = arith.cmpi sgt, %arg1, %c0_i32_11 : i32
    %19 = arith.extui %18 : i1 to i32
    %c0_i32_12 = arith.constant 0 : i32
    %20 = arith.cmpi ne, %19, %c0_i32_12 : i32
    scf.if %20 {
      %c0_13 = arith.constant 0 : index
      %c0_14 = arith.constant 0 : index
      %21 = vector.load %arg6[%c0_13, %c0_14] : memref<16x128xf32, #tpu.memory_space<vmem>>, vector<16x128xf32>
      %22 = arith.addf %21, %14 : vector<16x128xf32>
      %c0_15 = arith.constant 0 : index
      %c0_16 = arith.constant 0 : index
      %23 = vector.load %arg6[%c0_15, %c0_16] : memref<16x128xf32, #tpu.memory_space<vmem>>, vector<16x128xf32>
      tpu.vector_store %arg6[%c0_15, %c0_16], %22 {strides = array<i32>} : memref<16x128xf32, #tpu.memory_space<vmem>>, vector<16x128xf32>,
    } else {
    }
    return
  }
  func.func @transform_0(%arg0: i32, %arg1: i32) -> (i32, i32) {
    %c0_i32 = arith.constant 0 : i32
    %c0_i32_0 = arith.constant 0 : i32
    return %arg0, %c0_i32 : i32, i32
  }
  func.func @transform_1(%arg0: i32, %arg1: i32) -> (i32, i32) {
    %c0_i32 = arith.constant 0 : i32
    %c0_i32_0 = arith.constant 0 : i32
    return %c0_i32, %arg1 : i32, i32
  }
  func.func @transform_2(%arg0: i32, %arg1: i32) -> (i32, i32) {
    %c0_i32 = arith.constant 0 : i32
    %c0_i32_0 = arith.constant 0 : i32
    return %c0_i32, %arg1 : i32, i32
  }
  func.func @transform_3(%arg0: i32, %arg1: i32) -> (i32, i32) {
    %c0_i32 = arith.constant 0 : i32
    %c0_i32_0 = arith.constant 0 : i32
    return %arg1, %c0_i32 : i32, i32
  }
  func.func @transform_4(%arg0: i32, %arg1: i32) -> (i32, i32) {
    %c0_i32 = arith.constant 0 : i32
    %c0_i32_0 = arith.constant 0 : i32
    return %arg0, %c0_i32 : i32, i32
  }
}

</mosaic_0001>

<llo_original>
// kernel: tpu_custom_call.1
$region0: #{tpu_custom_call.1}
  #allocation0 [shape = 'u32[]', space=smem, size = 0x4, offset = 0x4, fixed_abs, tag = 'smem constant byte address 0x4 - core index']
  #allocation1 [shape = 'u32[72,128]{1,0:T(1,128)}', space=vmem, size = 0x9000, scoped, tag = 'internal scratch']
  %s0 = inlined_call_operand.hbm [shape: bf16[16,128], index: 0, kind: input, shape index: {}]
  %s1 = inlined_call_operand.hbm [shape: bf16[128,384], index: 1, kind: input, shape index: {}]
  %s2 = inlined_call_operand.hbm [shape: bf16[128,384], index: 2, kind: input, shape index: {}]
  %s3 = inlined_call_operand.hbm [shape: bf16[384,128], index: 3, kind: input, shape index: {}]
  %s4 = inlined_call_operand.hbm [shape: f32[16,128], index: 4, kind: output, shape index: {}]
  %s5 = sld [smem:[#allocation0]]
  $region73: #{tpu_custom_call.1} parent=0
    _
  %s7 = ssub.s32 1, %s5
  %s8 = scalar_select 0, %s7, %s5
  $region1: #{tpu_custom_call.1} parent=0
    #allocation2 [shape = 'u8[4096]{0}', space=vmem, size = 0x1000, scoped, tag = 'input window, operand 0, single buffered']
    #allocation3 [shape = 's32[2]{0}', space=sflag, size = 0x8, scoped, tag = 'scoped memory for tpu_custom_call.1']
    #allocation4 [shape = 's32[2]{0}', space=sflag, size = 0x8, scoped, tag = 'scoped memory for tpu_custom_call.1']
    #allocation5 [shape = 'u8[65536]{0}', space=vmem, size = 0x10000, scoped, tag = 'input window, operand 1']
    #allocation6 [shape = 's32[2]{0}', space=sflag, size = 0x8, scoped, tag = 'scoped memory for tpu_custom_call.1']
    #allocation7 [shape = 'u8[65536]{0}', space=vmem, size = 0x10000, scoped, tag = 'input window, operand 2']
    #allocation8 [shape = 'u8[65536]{0}', space=vmem, size = 0x10000, scoped, tag = 'input window, operand 3']
    #allocation9 [shape = 's32[2]{0}', space=sflag, size = 0x8, scoped, tag = 'scoped memory for tpu_custom_call.1']
    #allocation10 [shape = 'u8[8192]{0}', space=vmem, size = 0x2000, scoped, tag = 'output window, operand 0, single buffered']
    %9 = vsyncpa [#allocation3], 0
    %10 = vsyncpa [#allocation6], 0
    %s11 = scalar_lea.sflag [#allocation6], 1
    %12 = vsyncpa %s11, 0
    %13 = vsyncpa [#allocation9], 0
    %s14 = scalar_lea.sflag [#allocation9], 1
    %15 = vsyncpa %s14, 0
    %16 = vsyncpa [#allocation4], 0
    loop: start=0, step=1, limit=5
    $region2: #{tpu_custom_call.1} parent=1 // loop_pre_header
      _
    $region3: #{tpu_custom_call.1} parent=1 // loop_header
      %s18 = sphi 0, %s22
      %p19 = scmp.ge.s32.totalorder %s18, 5
      %s25 = sphi 0, %s37
      %s26 = sphi 0, %s33
      %s27 = sphi 0, %s25
      %s28 = sphi 0, %s26
      %s29 = sphi 0, %s27
      %s30 = sphi 0, %s28
      %s40 = sphi 0, %s42
      %s43 = sphi 0, %s40
      %s44 = sphi 0, %s43
      %s60 = sphi 0, %s44
      %s66 = sphi 0, %s68
      %s69 = sphi 0, %s66
      %s70 = sphi 0, %s69
      %s86 = sphi 0, %s70
      %s92 = sphi 0, %s94
      %s95 = sphi 0, %s92
      %s96 = sphi 0, %s95
      %s112 = sphi 0, %s96
      %s118 = sphi 0, %s120
      %s121 = sphi 0, %s118
      %s122 = sphi 0, %s121
      %s138 = sphi 0, %s122
      %s144 = sphi 0, %s146
      %s147 = sphi 0, %s144
      %s148 = sphi 0, %s147
      %s164 = sphi 0, %s148
    $region4: #{tpu_custom_call.1} parent=1 // loop_header_branch
      %21 = sbr.rel (%p19) target = $region8
    $region5: #{tpu_custom_call.1} parent=1 // loop_body
      %s23 = ssub.s32 %s18, 1
      %s24 = ssub.s32 %s18, 2
      %s31 = sadd.s32 1, %s26
      %p32 = scmp.ge.s32.totalorder %s31, 3
      %s33 = scalar_select %p32, 0, %s31
      %s34 = sadd.s32 1, %s25
      %s35 = scalar_select %p32, %s34, %s25
      %p36 = scmp.ge.s32.totalorder %s35, 1
      %s37 = scalar_select %p36, 0, %s35
      %s38 = ssub.s32 %s25, %s37
      %p39 = scmp.eq.s32.totalorder %s38, 0
      %s41 = sadd.s32 %s40, 1
      %s42 = scalar_select %p39, %s40, %s41
      %p45 = pneg %p39
      %p46 = scmp.eq.s32.totalorder %s18, 2
      %p47 = por %p45, %p46
      %p48 = scmp.ne.s32.totalorder %s40, %s43
      %p49 = scmp.eq.s32.totalorder %s18, 0
      %p50 = por %p48, %p49
      %p51 = scmp.ne.s32.totalorder %s40, %s43
      %p52 = scmp.eq.s32.totalorder %s23, 2
      %p53 = por %p51, %p52
      %p54 = scmp.ne.s32.totalorder %s43, %s44
      %p55 = scmp.eq.s32.totalorder %s23, 0
      %p56 = por %p54, %p55
      %p57 = scmp.ne.s32.totalorder %s43, %s44
      %p58 = scmp.eq.s32.totalorder %s24, 2
      %p59 = por %p57, %p58
      %p61 = scmp.ne.s32.totalorder %s44, %s60
      %p62 = scmp.eq.s32.totalorder %s24, 0
      %p63 = por %p61, %p62
      %s64 = ssub.s32 %s26, %s33
      %p65 = scmp.eq.s32.totalorder %s64, 0
      %s67 = sadd.s32 %s66, 1
      %s68 = scalar_select %p65, %s66, %s67
      %p71 = pneg %p65
      %p72 = scmp.eq.s32.totalorder %s18, 2
      %p73 = por %p71, %p72
      %p74 = scmp.ne.s32.totalorder %s66, %s69
      %p75 = scmp.eq.s32.totalorder %s18, 0
      %p76 = por %p74, %p75
      %p77 = scmp.ne.s32.totalorder %s66, %s69
      %p78 = scmp.eq.s32.totalorder %s23, 2
      %p79 = por %p77, %p78
      %p80 = scmp.ne.s32.totalorder %s69, %s70
      %p81 = scmp.eq.s32.totalorder %s23, 0
      %p82 = por %p80, %p81
      %p83 = scmp.ne.s32.totalorder %s69, %s70
      %p84 = scmp.eq.s32.totalorder %s24, 2
      %p85 = por %p83, %p84
      %p87 = scmp.ne.s32.totalorder %s70, %s86
      %p88 = scmp.eq.s32.totalorder %s24, 0
      %p89 = por %p87, %p88
      %s90 = ssub.s32 %s26, %s33
      %p91 = scmp.eq.s32.totalorder %s90, 0
      %s93 = sadd.s32 %s92, 1
      %s94 = scalar_select %p91, %s92, %s93
      %p97 = pneg %p91
      %p98 = scmp.eq.s32.totalorder %s18, 2
      %p99 = por %p97, %p98
      %p100 = scmp.ne.s32.totalorder %s92, %s95
      %p101 = scmp.eq.s32.totalorder %s18, 0
      %p102 = por %p100, %p101
      %p103 = scmp.ne.s32.totalorder %s92, %s95
      %p104 = scmp.eq.s32.totalorder %s23, 2
      %p105 = por %p103, %p104
      %p106 = scmp.ne.s32.totalorder %s95, %s96
      %p107 = scmp.eq.s32.totalorder %s23, 0
      %p108 = por %p106, %p107
      %p109 = scmp.ne.s32.totalorder %s95, %s96
      %p110 = scmp.eq.s32.totalorder %s24, 2
      %p111 = por %p109, %p110
      %p113 = scmp.ne.s32.totalorder %s96, %s112
      %p114 = scmp.eq.s32.totalorder %s24, 0
      %p115 = por %p113, %p114
      %s116 = ssub.s32 %s26, %s33
      %p117 = scmp.eq.s32.totalorder %s116, 0
      %s119 = sadd.s32 %s118, 1
      %s120 = scalar_select %p117, %s118, %s119
      %p123 = pneg %p117
      %p124 = scmp.eq.s32.totalorder %s18, 2
      %p125 = por %p123, %p124
      %p126 = scmp.ne.s32.totalorder %s118, %s121
      %p127 = scmp.eq.s32.totalorder %s18, 0
      %p128 = por %p126, %p127
      %p129 = scmp.ne.s32.totalorder %s118, %s121
      %p130 = scmp.eq.s32.totalorder %s23, 2
      %p131 = por %p129, %p130
      %p132 = scmp.ne.s32.totalorder %s121, %s122
      %p133 = scmp.eq.s32.totalorder %s23, 0
      %p134 = por %p132, %p133
      %p135 = scmp.ne.s32.totalorder %s121, %s122
      %p136 = scmp.eq.s32.totalorder %s24, 2
      %p137 = por %p135, %p136
      %p139 = scmp.ne.s32.totalorder %s122, %s138
      %p140 = scmp.eq.s32.totalorder %s24, 0
      %p141 = por %p139, %p140
      %s142 = ssub.s32 %s25, %s37
      %p143 = scmp.eq.s32.totalorder %s142, 0
      %s145 = sadd.s32 %s144, 1
      %s146 = scalar_select %p143, %s144, %s145
      %p149 = pneg %p143
      %p150 = scmp.eq.s32.totalorder %s18, 2
      %p151 = por %p149, %p150
      %p152 = scmp.ne.s32.totalorder %s144, %s147
      %p153 = scmp.eq.s32.totalorder %s18, 0
      %p154 = por %p152, %p153
      %p155 = scmp.ne.s32.totalorder %s144, %s147
      %p156 = scmp.eq.s32.totalorder %s23, 2
      %p157 = por %p155, %p156
      %p158 = scmp.ne.s32.totalorder %s147, %s148
      %p159 = scmp.eq.s32.totalorder %s23, 0
      %p160 = por %p158, %p159
      %p161 = scmp.ne.s32.totalorder %s147, %s148
      %p162 = scmp.eq.s32.totalorder %s24, 2
      %p163 = por %p161, %p162
      %p165 = scmp.ne.s32.totalorder %s148, %s164
      %p166 = scmp.eq.s32.totalorder %s24, 0
      %p167 = por %p165, %p166
      %p168 = scmp.le.s32.totalorder 1, %s18
      %p169 = scmp.lt.s32.totalorder %s18, 4
      %p170 = pnand %p168, %p169
      %p171 = pneg %p170
      // Predicated region
      $region9: #{tpu_custom_call.1} parent=5 // pred_check
        _
      $region10: #{tpu_custom_call.1} parent=5 // pred_check_branch
        %173 = sbr.rel (%p170) target = $region12
      $region11: #{tpu_custom_call.1} parent=5 // pred_region
        %s174 = ssub.s32 %s18, 1
        // Predicated region
        $region13: #{tpu_custom_call.1} parent=11 // pred_check
          %p175 = pneg %p56
        $region14: #{tpu_custom_call.1} parent=11 // pred_check_branch
          %177 = sbr.rel (%p175) target = $region16
        $region15: #{tpu_custom_call.1} parent=11 // pred_region
          %s178 = smul.u32 2, %s27
          %180 = vsyncadd [#allocation3], 0
          %s181 = smul.addr %s178, 4
          %s182 = scalar_lea.hbm %s0, %s181
          %s183 = sshll.u32 %s182, 4
          %s184 = int_to_ptr.hbm [resolvable:$true] %s183
          %s185 = sshll.u32 [#allocation2], 4
          %s186 = int_to_ptr.vmem [resolvable:$true] %s185
          %191 = dma.hbm_to_vmem [thread:$0]  %s184, 128, %s186, [#allocation3], 64, 64, 4
        $region16: #{tpu_custom_call.1} parent=11 // pred_fallthru
          _
      $region12: #{tpu_custom_call.1} parent=5 // pred_fallthru
        _
      %p192 = scmp.lt.s32.totalorder %s18, 3
      // Predicated region
      $region17: #{tpu_custom_call.1} parent=5 // pred_check
        %p193 = pneg %p192
      $region18: #{tpu_custom_call.1} parent=5 // pred_check_branch
        %195 = sbr.rel (%p193) target = $region20
      $region19: #{tpu_custom_call.1} parent=5 // pred_region
        // Predicated region
        $region21: #{tpu_custom_call.1} parent=19 // pred_check
          %p196 = pneg %p76
        $region22: #{tpu_custom_call.1} parent=19 // pred_check_branch
          %198 = sbr.rel (%p196) target = $region24
        $region23: #{tpu_custom_call.1} parent=19 // pred_region
          %s199 = sand.u32 %s18, 1
          %s200 = scalar_lea.sflag [#allocation6], %s199
          %s201 = sand.u32 %s66, 1
          %s202 = smul.addr %s201, 64
          %s203 = scalar_lea.vmem [#allocation5], %s202
          %205 = vsyncadd %s200, 0
          %s206 = smul.addr %s26, 4
          %s207 = scalar_lea.hbm %s1, %s206
          %s208 = sshll.u32 %s207, 4
          %s209 = int_to_ptr.hbm [resolvable:$true] %s208
          %s210 = sshll.u32 %s203, 4
          %s211 = int_to_ptr.vmem [resolvable:$true] %s210
          %216 = dma.hbm_to_vmem [thread:$0]  %s209, 1024, %s211, %s200, 192, 64, 4
        $region24: #{tpu_custom_call.1} parent=19 // pred_fallthru
          _
        // Predicated region
        $region25: #{tpu_custom_call.1} parent=19 // pred_check
          %p217 = pneg %p102
        $region26: #{tpu_custom_call.1} parent=19 // pred_check_branch
          %219 = sbr.rel (%p217) target = $region28
        $region27: #{tpu_custom_call.1} parent=19 // pred_region
          %s220 = sand.u32 %s18, 1
          %s221 = scalar_lea.sflag [#allocation6], %s220
          %s222 = sand.u32 %s92, 1
          %s223 = smul.addr %s222, 64
          %s224 = scalar_lea.vmem [#allocation7], %s223
          %226 = vsyncadd %s221, 0
          %s227 = smul.addr %s26, 4
          %s228 = scalar_lea.hbm %s2, %s227
          %s229 = sshll.u32 %s228, 4
          %s230 = int_to_ptr.hbm [resolvable:$true] %s229
          %s231 = sshll.u32 %s224, 4
          %s232 = int_to_ptr.vmem [resolvable:$true] %s231
          %237 = dma.hbm_to_vmem [thread:$0]  %s230, 1024, %s232, %s221, 192, 64, 4
        $region28: #{tpu_custom_call.1} parent=19 // pred_fallthru
          _
        // Predicated region
        $region29: #{tpu_custom_call.1} parent=19 // pred_check
          %p238 = pneg %p128
        $region30: #{tpu_custom_call.1} parent=19 // pred_check_branch
          %240 = sbr.rel (%p238) target = $region32
        $region31: #{tpu_custom_call.1} parent=19 // pred_region
          %s241 = sand.u32 %s118, 1
          %s242 = scalar_lea.sflag [#allocation9], %s241
          %s243 = sand.u32 %s118, 1
          %s244 = smul.addr %s243, 64
          %s245 = scalar_lea.vmem [#allocation8], %s244
          %s246 = smul.u32 16, %s26
          %248 = vsyncadd %s242, 0
          %s249 = smul.addr %s246, 4
          %s250 = scalar_lea.hbm %s3, %s249
          %s251 = sshll.u32 %s250, 4
          %s252 = int_to_ptr.hbm [resolvable:$true] %s251
          %s253 = sshll.u32 %s245, 4
          %s254 = int_to_ptr.vmem [resolvable:$true] %s253
          %259 = dma.hbm_to_vmem [thread:$0]  %s252, 1024, %s254, %s242, 64, 64, 4
        $region32: #{tpu_custom_call.1} parent=19 // pred_fallthru
          _
      $region20: #{tpu_custom_call.1} parent=5 // pred_fallthru
        _
      %p260 = scmp.le.s32.totalorder 1, %s18
      %p261 = scmp.lt.s32.totalorder %s18, 4
      %p262 = pnand %p260, %p261
      %p263 = pneg %p262
      // Predicated region
      $region33: #{tpu_custom_call.1} parent=5 // pred_check
        _
      $region34: #{tpu_custom_call.1} parent=5 // pred_check_branch
        %265 = sbr.rel (%p262) target = $region36
      $region35: #{tpu_custom_call.1} parent=5 // pred_region
        %s266 = ssub.s32 %s18, 1
        // Predicated region
        $region37: #{tpu_custom_call.1} parent=35 // pred_check
          %p267 = pneg %p56
        $region38: #{tpu_custom_call.1} parent=35 // pred_check_branch
          %269 = sbr.rel (%p267) target = $region40
        $region39: #{tpu_custom_call.1} parent=35 // pred_region
          %271 = dma.done [#allocation3], 128
        $region40: #{tpu_custom_call.1} parent=35 // pred_fallthru
          _
        %s272 = sand.u32 %s23, 1
        %s273 = scalar_lea.sflag [#allocation6], %s272
        %s274 = sand.u32 %s69, 1
        %s275 = smul.addr %s274, 64
        %s276 = scalar_lea.vmem [#allocation5], %s275
        // Predicated region
        $region41: #{tpu_custom_call.1} parent=35 // pred_check
          %p277 = pneg %p82
        $region42: #{tpu_custom_call.1} parent=35 // pred_check_branch
          %279 = sbr.rel (%p277) target = $region44
        $region43: #{tpu_custom_call.1} parent=35 // pred_region
          %281 = dma.done %s273, 1024
        $region44: #{tpu_custom_call.1} parent=35 // pred_fallthru
          _
        %s282 = sand.u32 %s23, 1
        %s283 = scalar_lea.sflag [#allocation6], %s282
        %s284 = sand.u32 %s95, 1
        %s285 = smul.addr %s284, 64
        %s286 = scalar_lea.vmem [#allocation7], %s285
        // Predicated region
        $region45: #{tpu_custom_call.1} parent=35 // pred_check
          %p287 = pneg %p108
        $region46: #{tpu_custom_call.1} parent=35 // pred_check_branch
          %289 = sbr.rel (%p287) target = $region48
        $region47: #{tpu_custom_call.1} parent=35 // pred_region
          %291 = dma.done %s283, 1024
        $region48: #{tpu_custom_call.1} parent=35 // pred_fallthru
          _
        %s292 = sand.u32 %s121, 1
        %s293 = scalar_lea.sflag [#allocation9], %s292
        %s294 = sand.u32 %s121, 1
        %s295 = smul.addr %s294, 64
        %s296 = scalar_lea.vmem [#allocation8], %s295
        // Predicated region
        $region49: #{tpu_custom_call.1} parent=35 // pred_check
          %p297 = pneg %p134
        $region50: #{tpu_custom_call.1} parent=35 // pred_check_branch
          %299 = sbr.rel (%p297) target = $region52
        $region51: #{tpu_custom_call.1} parent=35 // pred_region
          %301 = dma.done %s293, 1024
        $region52: #{tpu_custom_call.1} parent=35 // pred_fallthru
          _
        %p302 = pneg %p56
        %p303 = pneg %p53
        %s304 = sand.u32 %s23, 1
        %s305 = scalar_lea.sflag [#allocation6], %s304
        %s306 = sand.u32 %s69, 1
        %s307 = smul.addr %s306, 64
        %s308 = scalar_lea.vmem [#allocation5], %s307
        %p309 = pneg %p82
        %p310 = pneg %p79
        %s311 = sand.u32 %s23, 1
        %s312 = scalar_lea.sflag [#allocation6], %s311
        %s313 = sand.u32 %s95, 1
        %s314 = smul.addr %s313, 64
        %s315 = scalar_lea.vmem [#allocation7], %s314
        %p316 = pneg %p108
        %p317 = pneg %p105
        %s318 = sand.u32 %s121, 1
        %s319 = scalar_lea.sflag [#allocation9], %s318
        %s320 = sand.u32 %s121, 1
        %s321 = smul.addr %s320, 64
        %s322 = scalar_lea.vmem [#allocation8], %s321
        %p323 = pneg %p134
        %p324 = pneg %p131
        %p325 = pneg %p160
        %p326 = pneg %p157
        %s327 = smul.u32 2, %s27
        %s328 = smul.u32 16, %s28
        %s329 = smul.u32 2, %s27
        %v330 = vld [vmem:[#allocation2] sm:$0xf]
        %v331 = vld [vmem:[#allocation2 + $0x4] sm:$0xf]
        %v332 = vld [vmem:[%s276] sm:$0xf]
        %v333 = vld [vmem:[%s276 + $0x4] sm:$0xf]
        %v334 = vld [vmem:[%s276 + $0x8] sm:$0xf]
        %v335 = vld [vmem:[%s276 + $0xc] sm:$0xf]
        %v336 = vld [vmem:[%s276 + $0x10] sm:$0xf]
        %v337 = vld [vmem:[%s276 + $0x14] sm:$0xf]
        %v338 = vld [vmem:[%s276 + $0x18] sm:$0xf]
        %v339 = vld [vmem:[%s276 + $0x1c] sm:$0xf]
        %v340 = vld [vmem:[%s276 + $0x20] sm:$0xf]
        %v341 = vld [vmem:[%s276 + $0x24] sm:$0xf]
        %v342 = vld [vmem:[%s276 + $0x28] sm:$0xf]
        %v343 = vld [vmem:[%s276 + $0x2c] sm:$0xf]
        %v344 = vld [vmem:[%s276 + $0x30] sm:$0xf]
        %v345 = vld [vmem:[%s276 + $0x34] sm:$0xf]
        %v346 = vld [vmem:[%s276 + $0x38] sm:$0xf]
        %v347 = vld [vmem:[%s276 + $0x3c] sm:$0xf]
        %v350 = vunpack.c.l.b16 %v330
        %v351 = vunpack.c.l.b16 %v331
        %v352 = vpack.c.b16 %v351, %v350
        %v370 = vunpack.c.l.b16 %v332
        %v371 = vunpack.c.l.b16 %v333
        %v372 = vunpack.c.l.b16 %v334
        %v373 = vunpack.c.l.b16 %v335
        %v374 = vunpack.c.l.b16 %v336
        %v375 = vunpack.c.l.b16 %v337
        %v376 = vunpack.c.l.b16 %v338
        %v377 = vunpack.c.l.b16 %v339
        %v378 = vunpack.c.l.b16 %v340
        %v379 = vunpack.c.l.b16 %v341
        %v380 = vunpack.c.l.b16 %v342
        %v381 = vunpack.c.l.b16 %v343
        %v382 = vunpack.c.l.b16 %v344
        %v383 = vunpack.c.l.b16 %v345
        %v384 = vunpack.c.l.b16 %v346
        %v385 = vunpack.c.l.b16 %v347
        %v386 = vpack.c.b16 %v371, %v370
        %v387 = vpack.c.b16 %v373, %v372
        %v388 = vpack.c.b16 %v375, %v374
        %v389 = vpack.c.b16 %v377, %v376
        %v390 = vpack.c.b16 %v379, %v378
        %v391 = vpack.c.b16 %v381, %v380
        %v392 = vpack.c.b16 %v383, %v382
        %v393 = vpack.c.b16 %v385, %v384
        %402 = vmatpush.bf16.msra.mxu0 %v393
        %403 = vmatpush.bf16.msra.mxu0 %v392
        %404 = vmatpush.bf16.msra.mxu0 %v391
        %405 = vmatpush.bf16.msra.mxu0 %v390
        %406 = vmatpush.bf16.msra.mxu0 %v389
        %407 = vmatpush.bf16.msra.mxu0 %v388
        %408 = vmatpush.bf16.msra.mxu0 %v387
        %409 = vmatpush.bf16.msra.mxu0 %v386
        %410 = vmatmul.bf16.gmra.mxu0 %v352
        %v411 = vpop.f32.mrf.mxu0
        %v412 = vadd.f32 0.0, %v411
        %v413 = vpop.f32.mrf.mxu0
        %v414 = vadd.f32 0.0, %v413
        %415 = vdwg.mxu0
        %v416 = vld [vmem:[%s286] sm:$0xf]
        %v417 = vld [vmem:[%s286 + $0x4] sm:$0xf]
        %v418 = vld [vmem:[%s286 + $0x8] sm:$0xf]
        %v419 = vld [vmem:[%s286 + $0xc] sm:$0xf]
        %v420 = vld [vmem:[%s286 + $0x10] sm:$0xf]
        %v421 = vld [vmem:[%s286 + $0x14] sm:$0xf]
        %v422 = vld [vmem:[%s286 + $0x18] sm:$0xf]
        %v423 = vld [vmem:[%s286 + $0x1c] sm:$0xf]
        %v424 = vld [vmem:[%s286 + $0x20] sm:$0xf]
        %v425 = vld [vmem:[%s286 + $0x24] sm:$0xf]
        %v426 = vld [vmem:[%s286 + $0x28] sm:$0xf]
        %v427 = vld [vmem:[%s286 + $0x2c] sm:$0xf]
        %v428 = vld [vmem:[%s286 + $0x30] sm:$0xf]
        %v429 = vld [vmem:[%s286 + $0x34] sm:$0xf]
        %v430 = vld [vmem:[%s286 + $0x38] sm:$0xf]
        %v431 = vld [vmem:[%s286 + $0x3c] sm:$0xf]
        %v448 = vunpack.c.l.b16 %v416
        %v449 = vunpack.c.l.b16 %v417
        %v450 = vunpack.c.l.b16 %v418
        %v451 = vunpack.c.l.b16 %v419
        %v452 = vunpack.c.l.b16 %v420
        %v453 = vunpack.c.l.b16 %v421
        %v454 = vunpack.c.l.b16 %v422
        %v455 = vunpack.c.l.b16 %v423
        %v456 = vunpack.c.l.b16 %v424
        %v457 = vunpack.c.l.b16 %v425
        %v458 = vunpack.c.l.b16 %v426
        %v459 = vunpack.c.l.b16 %v427
        %v460 = vunpack.c.l.b16 %v428
        %v461 = vunpack.c.l.b16 %v429
        %v462 = vunpack.c.l.b16 %v430
        %v463 = vunpack.c.l.b16 %v431
        %v464 = vpack.c.b16 %v449, %v448
        %v465 = vpack.c.b16 %v451, %v450
        %v466 = vpack.c.b16 %v453, %v452
        %v467 = vpack.c.b16 %v455, %v454
        %v468 = vpack.c.b16 %v457, %v456
        %v469 = vpack.c.b16 %v459, %v458
        %v470 = vpack.c.b16 %v461, %v460
        %v471 = vpack.c.b16 %v463, %v462
        %480 = vmatpush.bf16.msra.mxu0 %v471
        %481 = vmatpush.bf16.msra.mxu0 %v470
        %482 = vmatpush.bf16.msra.mxu0 %v469
        %483 = vmatpush.bf16.msra.mxu0 %v468
        %484 = vmatpush.bf16.msra.mxu0 %v467
        %485 = vmatpush.bf16.msra.mxu0 %v466
        %486 = vmatpush.bf16.msra.mxu0 %v465
        %487 = vmatpush.bf16.msra.mxu0 %v464
        %488 = vmatmul.bf16.gmra.mxu0 %v352
        %v489 = vpop.f32.mrf.mxu0
        %v490 = vadd.f32 0.0, %v489
        %v491 = vpop.f32.mrf.mxu0
        %v492 = vadd.f32 0.0, %v491
        %493 = vdwg.mxu0
        %v494 = vxor.u32 %v412, 2147483648
        %v495 = vxor.u32 %v414, 2147483648
        %v496 = vmul.f32 %v494, 1.442695
        %v497 = vpow.pop %v496
        %v498 = vmul.f32 %v495, 1.442695
        %v499 = vpow.pop %v498
        %v500 = vadd.f32 %v497, 1.0
        %v501 = vadd.f32 %v499, 1.0
        %v502 = vrcp.pop %v500
        %v503 = vmul.f32 %v500, %v502
        %v504 = vsub.f32 1.0, %v503
        %v505 = vmul.f32 %v502, %v504
        %v506 = vadd.f32 %v502, %v505
        %vm507 = vweird.f32 %v500
        %vm508 = vweird.f32 %v502
        %vm509 = vmor %vm507, %vm508
        %v510 = vsel %vm509, %v502, %v506
        %v511 = vand.u32 2147483647, %v500
        %vm512 = vcmp.eq.f32.partialorder %v511, 8.507059e+37
        %v513 = vand.u32 %v500, 2147483648
        %v514 = vor.u32 1.1754944e-38, %v513
        %v515 = vsel %vm512, %v514, %v510
        %v516 = vmul.f32 1.0, %v515
        %v517 = vrcp.pop %v501
        %v518 = vmul.f32 %v501, %v517
        %v519 = vsub.f32 1.0, %v518
        %v520 = vmul.f32 %v517, %v519
        %v521 = vadd.f32 %v517, %v520
        %vm522 = vweird.f32 %v501
        %vm523 = vweird.f32 %v517
        %vm524 = vmor %vm522, %vm523
        %v525 = vsel %vm524, %v517, %v521
        %v526 = vand.u32 2147483647, %v501
        %vm527 = vcmp.eq.f32.partialorder %v526, 8.507059e+37
        %v528 = vand.u32 %v501, 2147483648
        %v529 = vor.u32 1.1754944e-38, %v528
        %v530 = vsel %vm527, %v529, %v525
        %v531 = vmul.f32 1.0, %v530
        %v532 = vmul.f32 %v412, %v516
        %v533 = vmul.f32 %v414, %v531
        %v534 = vmul.f32 %v532, %v490
        %v535 = vmul.f32 %v533, %v492
        %v536 = vpack.c.bf16 %v535, %v534
        %v537 = vld [vmem:[%s296] sm:$0xf]
        %v538 = vld [vmem:[%s296 + $0x4] sm:$0xf]
        %v539 = vld [vmem:[%s296 + $0x8] sm:$0xf]
        %v540 = vld [vmem:[%s296 + $0xc] sm:$0xf]
        %v541 = vld [vmem:[%s296 + $0x10] sm:$0xf]
        %v542 = vld [vmem:[%s296 + $0x14] sm:$0xf]
        %v543 = vld [vmem:[%s296 + $0x18] sm:$0xf]
        %v544 = vld [vmem:[%s296 + $0x1c] sm:$0xf]
        %v545 = vld [vmem:[%s296 + $0x20] sm:$0xf]
        %v546 = vld [vmem:[%s296 + $0x24] sm:$0xf]
        %v547 = vld [vmem:[%s296 + $0x28] sm:$0xf]
        %v548 = vld [vmem:[%s296 + $0x2c] sm:$0xf]
        %v549 = vld [vmem:[%s296 + $0x30] sm:$0xf]
        %v550 = vld [vmem:[%s296 + $0x34] sm:$0xf]
        %v551 = vld [vmem:[%s296 + $0x38] sm:$0xf]
        %v552 = vld [vmem:[%s296 + $0x3c] sm:$0xf]
        %v569 = vunpack.c.l.b16 %v537
        %v570 = vunpack.c.l.b16 %v538
        %v571 = vunpack.c.l.b16 %v539
        %v572 = vunpack.c.l.b16 %v540
        %v573 = vunpack.c.l.b16 %v541
        %v574 = vunpack.c.l.b16 %v542
        %v575 = vunpack.c.l.b16 %v543
        %v576 = vunpack.c.l.b16 %v544
        %v577 = vunpack.c.l.b16 %v545
        %v578 = vunpack.c.l.b16 %v546
        %v579 = vunpack.c.l.b16 %v547
        %v580 = vunpack.c.l.b16 %v548
        %v581 = vunpack.c.l.b16 %v549
        %v582 = vunpack.c.l.b16 %v550
        %v583 = vunpack.c.l.b16 %v551
        %v584 = vunpack.c.l.b16 %v552
        %v585 = vpack.c.b16 %v570, %v569
        %v586 = vpack.c.b16 %v572, %v571
        %v587 = vpack.c.b16 %v574, %v573
        %v588 = vpack.c.b16 %v576, %v575
        %v589 = vpack.c.b16 %v578, %v577
        %v590 = vpack.c.b16 %v580, %v579
        %v591 = vpack.c.b16 %v582, %v581
        %v592 = vpack.c.b16 %v584, %v583
        %601 = vmatpush.bf16.msra.mxu0 %v592
        %602 = vmatpush.bf16.msra.mxu0 %v591
        %603 = vmatpush.bf16.msra.mxu0 %v590
        %604 = vmatpush.bf16.msra.mxu0 %v589
        %605 = vmatpush.bf16.msra.mxu0 %v588
        %606 = vmatpush.bf16.msra.mxu0 %v587
        %607 = vmatpush.bf16.msra.mxu0 %v586
        %608 = vmatpush.bf16.msra.mxu0 %v585
        %609 = vmatmul.bf16.gmra.mxu0 %v536
        %v610 = vpop.f32.mrf.mxu0
        %v611 = vadd.f32 0.0, %v610
        %v612 = vpop.f32.mrf.mxu0
        %v613 = vadd.f32 0.0, %v612
        %614 = vdwg.mxu0
        %p615 = scmp.eq.s32.totalorder %s28, 0
        // Predicated region
        $region53: #{tpu_custom_call.1} parent=35 // pred_check
          %p616 = pneg %p615
        $region54: #{tpu_custom_call.1} parent=35 // pred_check_branch
          %618 = sbr.rel (%p616) target = $region56
        $region55: #{tpu_custom_call.1} parent=35 // pred_region
          %619 = vst [vmem:[#allocation10] sm:$0xff] %v611
          %620 = vst [vmem:[#allocation10 + $0x8] sm:$0xff] %v613
        $region56: #{tpu_custom_call.1} parent=35 // pred_fallthru
          _
        %p621 = scmp.gt.s32.totalorder %s28, 0
        // Predicated region
        $region57: #{tpu_custom_call.1} parent=35 // pred_check
          %p622 = pneg %p621
        $region58: #{tpu_custom_call.1} parent=35 // pred_check_branch
          %624 = sbr.rel (%p622) target = $region60
        $region59: #{tpu_custom_call.1} parent=35 // pred_region
          %v625 = vld [vmem:[#allocation10] sm:$0xff]
          %v626 = vld [vmem:[#allocation10 + $0x8] sm:$0xff]
          %v627 = vadd.f32 %v625, %v611
          %v628 = vadd.f32 %v626, %v613
          %629 = vst [vmem:[#allocation10] sm:$0xff] %v627
          %630 = vst [vmem:[#allocation10 + $0x8] sm:$0xff] %v628
        $region60: #{tpu_custom_call.1} parent=35 // pred_fallthru
          _
        // Predicated region
        $region61: #{tpu_custom_call.1} parent=35 // pred_check
          %p631 = pneg %p157
        $region62: #{tpu_custom_call.1} parent=35 // pred_check_branch
          %633 = sbr.rel (%p631) target = $region64
        $region63: #{tpu_custom_call.1} parent=35 // pred_region
          %s634 = smul.u32 2, %s27
          %636 = vsyncadd [#allocation4], 0
          %s637 = smul.addr %s634, 8
          %s638 = scalar_lea.hbm %s4, %s637
          %s639 = sshll.u32 [#allocation10], 4
          %s640 = int_to_ptr.vmem [resolvable:$true] %s639
          %s641 = sshll.u32 %s638, 4
          %s642 = int_to_ptr.hbm [resolvable:$true] %s641
          %647 = dma.vmem_to_hbm [thread:$0]  %s640, 256, %s642, [#allocation4], 128, 128, 8
        $region64: #{tpu_custom_call.1} parent=35 // pred_fallthru
          _
        // Predicated region
        $region65: #{tpu_custom_call.1} parent=35 // pred_check
          %p648 = pneg %p157
        $region66: #{tpu_custom_call.1} parent=35 // pred_check_branch
          %650 = sbr.rel (%p648) target = $region68
        $region67: #{tpu_custom_call.1} parent=35 // pred_region
          %652 = dma.done [#allocation4], 256
        $region68: #{tpu_custom_call.1} parent=35 // pred_fallthru
          _
      $region36: #{tpu_custom_call.1} parent=5 // pred_fallthru
        _
      %p653 = scmp.le.s32.totalorder 2, %s18
      // Predicated region
      $region69: #{tpu_custom_call.1} parent=5 // pred_check
        %p654 = pneg %p653
      $region70: #{tpu_custom_call.1} parent=5 // pred_check_branch
        %656 = sbr.rel (%p654) target = $region72
      $region71: #{tpu_custom_call.1} parent=5 // pred_region
        %s657 = ssub.s32 %s18, 2
      $region72: #{tpu_custom_call.1} parent=5 // pred_fallthru
        _
    $region6: #{tpu_custom_call.1} parent=1 // loop_footer
      %s22 = sadd.s32 1, %s18
    $region7: #{tpu_custom_call.1} parent=1 // loop_footer_branch
      %17 = sbr.rel target = $region3
    $region8: #{tpu_custom_call.1} parent=1 // loop_exit
      _
    %658 = vsyncpa [#allocation3], 1
    %s659 = scalar_lea.sflag [#allocation3], 1
    %660 = vsyncpa %s659, 1
    %661 = vsyncpa [#allocation6], 1
    %s662 = scalar_lea.sflag [#allocation6], 1
    %663 = vsyncpa %s662, 1
    %664 = vsyncpa [#allocation9], 1
    %s665 = scalar_lea.sflag [#allocation9], 1
    %666 = vsyncpa %s665, 1
    %667 = vsyncpa [#allocation4], 1
    %s668 = scalar_lea.sflag [#allocation4], 1
    %669 = vsyncpa %s668, 1

</llo_original>
